<compile_context>
chip_gen: v6e
topology: v6e:2x2x1
jax: 0.10.0
libtpu: 0.0.40
codegen_flags: <defaults>
</compile_context>

<pallas_src>
import jax
import jax.numpy as jnp
from jax.experimental import pallas as pl
from jax.experimental.pallas import tpu as pltpu

LANE = 128
# 8 MiB per block buffer; double-buffered input + output ~= 32 MiB pipelined
# footprint.  Fits under the raised 40 MiB scoped-VMEM limit on every chip
# (64 MiB physical on v7x, 128 MiB on v5e/v6e).
MAX_BLOCK_BYTES = 8 * 1024 * 1024
VMEM_LIMIT_BYTES = 40 * 1024 * 1024


def _robust_scale_kernel(stats_ref, x_ref, o_ref):
    # stats_ref: SMEM, shape (2,) f32 -> [median, iqr]
    median = stats_ref[0]
    iqr = stats_ref[1]
    # Upcast to f32 in-register (no-op for f32 inputs; required for bf16 on
    # v5e whose VPU lacks bf16 arithmetic), compute, store in native dtype.
    # TODO(synk): median/iqr are float64 buffers in torch; f32 is an
    # intentional precision concession on TPU.
    x = x_ref[...].astype(jnp.float32)
    o_ref[...] = ((x - median) / iqr).astype(o_ref.dtype)


def _round_up(a: int, b: int) -> int:
    return -(-a // b) * b


def robust_scale_forward(x: jax.Array, median: jax.Array, iqr: jax.Array) -> jax.Array:
    """Applies (x - median) / iqr elementwise via a Pallas TPU kernel."""
    orig_shape = x.shape
    dtype = x.dtype
    itemsize = jnp.dtype(dtype).itemsize
    # Native (sublane, 128) tile granule for this dtype: 8 rows for 32-bit,
    # 16 for bf16/f16, 32 for 8-bit.
    granule = max(8, 32 // max(itemsize, 1))

    flat = x.reshape(-1)  # keep native dtype end-to-end (no wrapper casts)
    n = flat.shape[0]

    # Pad only if the element count is not a multiple of the 128-lane width
    # (required to form the [rows, 128] slab at all).  For aligned sizes this
    # emits no pad / no tail slice -> no extra HBM traffic.
    # TODO(synk): a fully pad-free ragged tail would need in-kernel masked
    # stores + element-granular DMA; not worth it for an elementwise op.
    rows = -(-n // LANE)
    pad = rows * LANE - n
    if pad > 0:
        flat = jnp.pad(flat, (0, pad))
    slab = flat.reshape(rows, LANE)

    # Byte-budgeted block: as many rows as fit MAX_BLOCK_BYTES, rounded down
    # to the dtype granule (16384 rows for f32, 32768 for bf16, 65536 for i8).
    budget_rows = max((MAX_BLOCK_BYTES // (LANE * itemsize)) // granule * granule, granule)
    if rows <= budget_rows:
        # Single block covering the whole slab (block == full array dims, so
        # it is exempt from the (8,128) divisibility requirement).
        block_rows = rows
    else:
        # Granule-multiple block; Pallas masks the partial last block.
        block_rows = budget_rows
    grid = (pl.cdiv(rows, block_rows),)

    # Scalars in f32 (TPU has no f64 vector math).  No iqr==0 guard: matches
    # torch's (x - median) / iqr, which produces inf/nan for iqr == 0.
    stats = jnp.stack([median.astype(jnp.float32), iqr.astype(jnp.float32)])

    cost = pl.CostEstimate(
        flops=2 * n,
        transcendentals=0,
        bytes_accessed=2 * n * itemsize,
    )

    out_slab = pl.pallas_call(
        _robust_scale_kernel,
        out_shape=jax.ShapeDtypeStruct((rows, LANE), dtype),
        grid_spec=pltpu.PrefetchScalarGridSpec(
            num_scalar_prefetch=0,
            grid=grid,
            in_specs=[
                pl.BlockSpec(memory_space=pltpu.MemorySpace.SMEM),   # stats scalars
                pl.BlockSpec((block_rows, LANE), lambda i: (i, 0)),  # x tile
            ],
            out_specs=pl.BlockSpec((block_rows, LANE), lambda i: (i, 0)),
        ),
        compiler_params=pltpu.CompilerParams(
            dimension_semantics=("parallel",),
            vmem_limit_bytes=VMEM_LIMIT_BYTES,
        ),
        cost_estimate=cost,
    )(stats, slab)

    if pad > 0:
        return out_slab.reshape(-1)[:n].reshape(orig_shape)
    return out_slab.reshape(orig_shape)


if __name__ == "__main__":
    key = jax.random.PRNGKey(0)
    # Small NCHW-ish input, consistent with an arbitrary-shape elementwise forward.
    x = jax.random.normal(key, (2, 4, 16, 16), dtype=jnp.float32) * 3.0 + 1.5

    # "apply_stats" phase emulated in plain JAX (deterministic, data-derived):
    # median = quantile(0.5), iqr = quantile(0.75) - quantile(0.25).
    # TODO(synk): the t-digest streaming estimator (TDigest._process etc.) is a
    # sequential, data-dependent state machine with no clean Pallas equivalent;
    # exact quantiles are used for the synthetic stats instead.
    flat = x.reshape(-1).astype(jnp.float32)
    median = jnp.quantile(flat, 0.5)
    q1 = jnp.quantile(flat, 0.25)
    q3 = jnp.quantile(flat, 0.75)
    iqr = q3 - q1

    y = robust_scale_forward(x, median, iqr)
    y = jax.block_until_ready(y)

    # Sanity check against the plain-JAX reference of the forward pass.
    ref = (x - median) / iqr
    assert y.shape == x.shape and y.dtype == x.dtype
    assert jnp.allclose(y, ref, atol=1e-5, rtol=1e-5)

    print("KERNEL_OK")
</pallas_src>

<mosaic_0001>
module attributes {stable_mosaic.version = 11 : i64} {
  func.func @_robust_scale_kernel(%arg0: i32, %arg1: memref<2xf32, #tpu.memory_space<smem>>, %arg2: memref<16x128xf32, #tpu.memory_space<vmem>>, %arg3: memref<16x128xf32, #tpu.memory_space<vmem>>) attributes {dimension_semantics = [#tpu.dimension_semantics<parallel>], iteration_bounds = array<i64: 1>, scalar_prefetch = 0 : i64, scratch_operands = 0 : i64, tpu.core_type = #tpu.core_type<tc>, window_params = [{transform_indices = @transform_0, window_bounds = array<i64: 2>}, {transform_indices = @transform_1, window_bounds = array<i64: 16, 128>}, {transform_indices = @transform_2, window_bounds = array<i64: 16, 128>}]} {
    %c0 = arith.constant 0 : index
    %0 = memref.load %arg1[%c0] : memref<2xf32, #tpu.memory_space<smem>>
    %c1 = arith.constant 1 : index
    %1 = memref.load %arg1[%c1] : memref<2xf32, #tpu.memory_space<smem>>
    %c0_0 = arith.constant 0 : index
    %c0_1 = arith.constant 0 : index
    %2 = vector.load %arg2[%c0_0, %c0_1] : memref<16x128xf32, #tpu.memory_space<vmem>>, vector<16x128xf32>
    %3 = vector.broadcast %0 : f32 to vector<16x128xf32>
    %4 = arith.subf %2, %3 : vector<16x128xf32>
    %5 = vector.broadcast %1 : f32 to vector<16x128xf32>
    %6 = arith.divf %4, %5 : vector<16x128xf32>
    %c0_2 = arith.constant 0 : index
    %c0_3 = arith.constant 0 : index
    %7 = vector.load %arg3[%c0_2, %c0_3] : memref<16x128xf32, #tpu.memory_space<vmem>>, vector<16x128xf32>
    tpu.vector_store %arg3[%c0_2, %c0_3], %6 {strides = array<i32>} : memref<16x128xf32, #tpu.memory_space<vmem>>, vector<16x128xf32>,
    return
  }
  func.func @transform_0(%arg0: i32) -> i32 {
    %c0_i32 = arith.constant 0 : i32
    %c0_i32_0 = arith.constant 0 : i32
    return %c0_i32 : i32
  }
  func.func @transform_1(%arg0: i32) -> (i32, i32) {
    %c0_i32 = arith.constant 0 : i32
    %c0_i32_0 = arith.constant 0 : i32
    return %arg0, %c0_i32 : i32, i32
  }
  func.func @transform_2(%arg0: i32) -> (i32, i32) {
    %c0_i32 = arith.constant 0 : i32
    %c0_i32_0 = arith.constant 0 : i32
    return %arg0, %c0_i32 : i32, i32
  }
}

</mosaic_0001>

<llo_original>
// kernel: tpu_custom_call.1
$region0: #{tpu_custom_call.1}
  #allocation0 [shape = 'u32[]', space=smem, size = 0x4, offset = 0x4, fixed_abs, tag = 'smem constant byte address 0x4 - core index']
  #allocation1 [shape = 'u32[144,128]{1,0:T(1,128)}', space=vmem, size = 0x12000, scoped, tag = 'internal scratch']
  %s0 = inlined_call_operand.hbm [shape: f32[2], index: 0, kind: input, shape index: {}]
  %s1 = inlined_call_operand.hbm [shape: f32[16,128], index: 1, kind: input, shape index: {}]
  %s2 = inlined_call_operand.hbm [shape: f32[16,128], index: 2, kind: output, shape index: {}]
  %s3 = sld [smem:[#allocation0]]
  $region26: #{tpu_custom_call.1} parent=0
    _
  %s5 = ssub.s32 1, %s3
  %s6 = scalar_select 0, %s5, %s3
  $region1: #{tpu_custom_call.1} parent=0
    #allocation2 [shape = 'u8[512]{0}', space=smem, size = 0x200, scoped, tag = 'input window, operand 0, single buffered']
    #allocation3 [shape = 's32[1]{0}', space=sflag, size = 0x4, scoped, tag = 'scoped memory for tpu_custom_call.1']
    #allocation4 [shape = 's32[1]{0}', space=sflag, size = 0x4, scoped, tag = 'scoped memory for tpu_custom_call.1']
    #allocation5 [shape = 's32[1]{0}', space=sflag, size = 0x4, scoped, tag = 'scoped memory for tpu_custom_call.1']
    #allocation6 [shape = 'u8[8192]{0}', space=vmem, size = 0x2000, scoped, tag = 'input window, operand 1, single buffered']
    #allocation7 [shape = 'u8[8192]{0}', space=vmem, size = 0x2000, scoped, tag = 'output window, operand 0, single buffered']
    %7 = vsyncpa [#allocation5], 0
    %8 = vsyncpa [#allocation3], 0
    %9 = vsyncpa [#allocation4], 0
    // Predicated region
    $region2: #{tpu_custom_call.1} parent=1 // pred_check
      _
    $region3: #{tpu_custom_call.1} parent=1 // pred_check_branch
      %11 = sbr.rel (0) target = $region5
    $region4: #{tpu_custom_call.1} parent=1 // pred_region
      %s13 = ssub.s32 16, 16
      %14 = vsyncadd [#allocation5], %s13
      %17 = dma.hbm_to_smem %s0, 16, [#allocation2], [#allocation5]
    $region5: #{tpu_custom_call.1} parent=1 // pred_fallthru
      _
    // Predicated region
    $region6: #{tpu_custom_call.1} parent=1 // pred_check
      _
    $region7: #{tpu_custom_call.1} parent=1 // pred_check_branch
      %19 = sbr.rel (0) target = $region9
    $region8: #{tpu_custom_call.1} parent=1 // pred_region
      %s21 = ssub.s32 256, 256
      %22 = vsyncadd [#allocation3], %s21
      %s23 = sshll.u32 [#allocation6], 4
      %s24 = int_to_ptr.vmem [resolvable:$true] %s23
      %29 = dma.hbm_to_vmem [thread:$0]  %s1, 256, %s24, [#allocation3], 128, 128, 8
    $region9: #{tpu_custom_call.1} parent=1 // pred_fallthru
      _
    // Predicated region
    $region10: #{tpu_custom_call.1} parent=1 // pred_check
      _
    $region11: #{tpu_custom_call.1} parent=1 // pred_check_branch
      %31 = sbr.rel (0) target = $region13
    $region12: #{tpu_custom_call.1} parent=1 // pred_region
      %32 = dma.done [#allocation5], 16
    $region13: #{tpu_custom_call.1} parent=1 // pred_fallthru
      _
    // Predicated region
    $region14: #{tpu_custom_call.1} parent=1 // pred_check
      _
    $region15: #{tpu_custom_call.1} parent=1 // pred_check_branch
      %34 = sbr.rel (0) target = $region17
    $region16: #{tpu_custom_call.1} parent=1 // pred_region
      %35 = dma.done [#allocation3], 256
    $region17: #{tpu_custom_call.1} parent=1 // pred_fallthru
      _
    %36 = sfence
    %s37 = sld [smem:[#allocation2]]
    %s38 = sld [smem:[#allocation2 + $0x1]]
    %v39 = vld [vmem:[#allocation6] sm:$0xff]
    %v40 = vld [vmem:[#allocation6 + $0x8] sm:$0xff]
    %v41 = vstv %s37
    %v42 = vsub.f32 %v39, %v41
    %v43 = vsub.f32 %v40, %v41
    %v44 = vstv %s38
    %v45 = vrcp.pop %v44
    %v46 = vmul.f32 %v42, %v45
    %v47 = vmul.f32 %v43, %v45
    %48 = vst [vmem:[#allocation7] sm:$0xff] %v46
    %49 = vst [vmem:[#allocation7 + $0x8] sm:$0xff] %v47
    // Predicated region
    $region18: #{tpu_custom_call.1} parent=1 // pred_check
      _
    $region19: #{tpu_custom_call.1} parent=1 // pred_check_branch
      %51 = sbr.rel (0) target = $region21
    $region20: #{tpu_custom_call.1} parent=1 // pred_region
      %s53 = ssub.s32 256, 256
      %54 = vsyncadd [#allocation4], %s53
      %s55 = sshll.u32 [#allocation7], 4
      %s56 = int_to_ptr.vmem [resolvable:$true] %s55
      %61 = dma.vmem_to_hbm [thread:$0]  %s56, 256, %s2, [#allocation4], 128, 128, 8
    $region21: #{tpu_custom_call.1} parent=1 // pred_fallthru
      _
    // Predicated region
    $region22: #{tpu_custom_call.1} parent=1 // pred_check
      _
    $region23: #{tpu_custom_call.1} parent=1 // pred_check_branch
      %63 = sbr.rel (0) target = $region25
    $region24: #{tpu_custom_call.1} parent=1 // pred_region
      %64 = dma.done [#allocation4], 256
    $region25: #{tpu_custom_call.1} parent=1 // pred_fallthru
      _
    %65 = vsyncpa [#allocation3], 1
    %66 = vsyncpa [#allocation4], 1
    %67 = vsyncpa [#allocation5], 1

</llo_original>
